<compile_context>
chip_gen: v5e
topology: v5e:2x2
jax: 0.10.0
libtpu: 0.0.40
codegen_flags: <defaults>
</compile_context>

<pallas_src>
import functools

import jax
import jax.numpy as jnp
from jax.experimental import pallas as pl
from jax.experimental.pallas import tpu as pltpu


def _vmem_capacity_bytes():
    """Physical VMEM per TensorCore; conservative (v7x) default if unknown."""
    try:
        cap = int(pltpu.get_tpu_info().vmem_capacity_bytes)
        if cap > 0:
            return cap
    except Exception:
        pass
    return 64 * 1024 * 1024


def _loss_rows(x, tgt, *, confidence, smoothing):
    """Per-row label-smoothed CE for one [TB, C] tile.  Returns [TB, 1] f32."""
    c = x.shape[-1]
    x = x.astype(jnp.float32)
    m = jnp.max(x, axis=-1, keepdims=True)                              # [TB,1]
    shifted = x - m                                                     # [TB,C]
    lse = jnp.log(jnp.sum(jnp.exp(shifted), axis=-1, keepdims=True))    # [TB,1]
    # "gather(dim=1, index=target)" as a lane-parallel one-hot select,
    # without materializing log_probs = shifted - lse.
    col = jax.lax.broadcasted_iota(jnp.int32, shifted.shape, 1)         # [TB,C]
    tgt_val = jnp.sum(jnp.where(col == tgt, shifted, 0.0),
                      axis=-1, keepdims=True)                           # shifted[i, t_i]
    row_sum = jnp.sum(shifted, axis=-1, keepdims=True)                  # [TB,1]
    nll = lse - tgt_val                    # -log_probs[i, target[i]]
    smooth = lse - row_sum * (1.0 / c)     # -mean(log_probs, axis=1)
    return confidence * nll + smoothing * smooth                        # [TB,1]


def _ls_ce_kernel(logits_ref, target_ref, loss_ref, *,
                  confidence, smoothing, lane_major):
    loss = _loss_rows(logits_ref[...], target_ref[...],
                      confidence=confidence, smoothing=smoothing)
    if lane_major:
        loss_ref[...] = jnp.transpose(loss)     # [1, TB] lane-dense store
    else:
        loss_ref[...] = loss                    # [TB, 1] fallback layout


def _ls_ce_kernel_weighted(logits_ref, target_ref, wt_ref, loss_ref, *,
                           confidence, smoothing, lane_major):
    loss = _loss_rows(logits_ref[...], target_ref[...],
                      confidence=confidence, smoothing=smoothing)
    loss = loss * wt_ref[...].astype(jnp.float32)   # weight[target], pre-gathered
    if lane_major:
        loss_ref[...] = jnp.transpose(loss)
    else:
        loss_ref[...] = loss


def _pick_batch_tile(n, c, itemsize):
    """Returns (batch tile size, lane_major output?)."""
    vmem_cap = _vmem_capacity_bytes()
    # Per logits buffer (double-buffered by the pipeline): ~VMEM/5, capped.
    budget = min(32 * 1024 * 1024, max(4 * 1024 * 1024, vmem_cap // 5))
    sub = max(8, 32 // itemsize)            # sublane pack: 8 f32 / 16 bf16 / 32 int8
    tb = budget // max(1, c * itemsize)
    tb = max(sub, min(tb, 32768))

    if tb >= n:
        if n >= 256:
            # Split into >=2 blocks (multiples of 128) so both v7x TCs get work.
            tb = (n // 2) // 128 * 128
        else:
            return n, True                  # single block == full dims (legal)
    if tb >= 128:
        return (tb // 128) * 128, True      # lane-dense output rows
    # Huge-C corner: fewer than 128 rows fit the budget -> sublane-aligned
    # column output (always legal).
    # TODO(synk): add a class-axis grid with online-LSE accumulation for
    # vocab-scale C instead of relying on tiny batch tiles.
    return max(sub, (tb // sub) * sub), False


def label_smoothing_cross_entropy(logits, target, *, smoothing=0.1,
                                  weight=None, reduction="mean"):
    """logits: [N, C] float; target: [N] int; weight: optional [C] float."""
    n, c = logits.shape
    confidence = 1.0 - smoothing
    itemsize = jnp.dtype(logits.dtype).itemsize
    tb, lane_major = _pick_batch_tile(n, c, itemsize)
    num_tiles = pl.cdiv(n, tb)
    n_pad = num_tiles * tb

    target_col = target.astype(jnp.int32).reshape(n, 1)
    inputs = [logits, target_col]
    in_specs = [
        pl.BlockSpec((tb, c), lambda i: (i, 0)),     # logits tile (pipelined)
        pl.BlockSpec((tb, 1), lambda i: (i, 0)),     # targets tile
    ]
    if weight is not None:
        # O(N) gather done once in XLA; kernel only multiplies a column.
        wt = jnp.take(jnp.asarray(weight, jnp.float32),
                      target.astype(jnp.int32), axis=0).reshape(n, 1)
        inputs.append(wt)
        in_specs.append(pl.BlockSpec((tb, 1), lambda i: (i, 0)))
        kernel = functools.partial(_ls_ce_kernel_weighted,
                                   confidence=float(confidence),
                                   smoothing=float(smoothing),
                                   lane_major=lane_major)
    else:
        kernel = functools.partial(_ls_ce_kernel,
                                   confidence=float(confidence),
                                   smoothing=float(smoothing),
                                   lane_major=lane_major)

    if lane_major:
        out_shape = jax.ShapeDtypeStruct((1, n_pad), jnp.float32)
        out_spec = pl.BlockSpec((1, tb), lambda i: (0, i))
    else:
        out_shape = jax.ShapeDtypeStruct((n_pad, 1), jnp.float32)
        out_spec = pl.BlockSpec((tb, 1), lambda i: (i, 0))

    # VMEM limit = actual need (double-buffered logits + small buffers) +
    # headroom; never request the whole physical VMEM (matters on v7x).
    vmem_cap = _vmem_capacity_bytes()
    need = 2 * tb * c * itemsize + 8 * tb * 4 + (8 << 20)
    vmem_limit = int(min(max(need, 32 << 20), vmem_cap - (4 << 20)))

    cost = pl.CostEstimate(flops=8 * n * c,
                           transcendentals=n * c,
                           bytes_accessed=n * c * itemsize + 3 * n * 4)

    per_example = pl.pallas_call(
        kernel,
        out_shape=out_shape,
        grid=(num_tiles,),
        in_specs=in_specs,
        out_specs=out_spec,
        compiler_params=pltpu.CompilerParams(
            dimension_semantics=("parallel",),   # megacore on v7x, no-op elsewhere
            vmem_limit_bytes=vmem_limit,
        ),
        cost_estimate=cost,
    )(*inputs)

    per_example = per_example.reshape(-1)[:n]
    if reduction == "mean":
        return jnp.mean(per_example)
    if reduction == "sum":
        return jnp.sum(per_example)
    return per_example                           # 'none'


def label_smoothing_cross_entropy_ref(logits, target, *, smoothing=0.1,
                                      weight=None, reduction="mean"):
    logp = jax.nn.log_softmax(logits.astype(jnp.float32), axis=1)
    nll = -jnp.take_along_axis(logp, target[:, None], axis=1)[:, 0]
    smooth = -jnp.mean(logp, axis=1)
    loss = (1.0 - smoothing) * nll + smoothing * smooth
    if weight is not None:
        loss = loss * weight[target]
    if reduction == "mean":
        return jnp.mean(loss)
    if reduction == "sum":
        return jnp.sum(loss)
    return loss


if __name__ == "__main__":
    key = jax.random.PRNGKey(0)
    smoothing = 0.1

    ok = True
    # Small shapes consistent with a classification loss; second case is
    # a non-multiple-of-8 batch to exercise ragged handling.
    for (n, c) in [(8, 16), (37, 24)]:
        k_logits, k_target, k_weight, key = jax.random.split(key, 4)
        logits = jax.random.normal(k_logits, (n, c), dtype=jnp.float32) * 2.0
        target = jax.random.randint(k_target, (n,), 0, c, dtype=jnp.int32)
        class_weight = jax.random.uniform(k_weight, (c,), dtype=jnp.float32) + 0.5

        for w, red in [(class_weight, "mean"), (None, "sum"), (class_weight, "none")]:
            out = label_smoothing_cross_entropy(logits, target, smoothing=smoothing,
                                                weight=w, reduction=red)
            out = jax.block_until_ready(out)
            ref = label_smoothing_cross_entropy_ref(logits, target, smoothing=smoothing,
                                                    weight=w, reduction=red)
            ok = ok and bool(jnp.allclose(out, ref, atol=1e-5, rtol=1e-5))

    assert ok
    print("KERNEL_OK")
</pallas_src>

<mosaic_0001>
module attributes {stable_mosaic.version = 11 : i64} {
  func.func @_ls_ce_kernel_weighted(%arg0: i32, %arg1: memref<8x16xf32, #tpu.memory_space<vmem>>, %arg2: memref<8x1xi32, #tpu.memory_space<vmem>>, %arg3: memref<8x1xf32, #tpu.memory_space<vmem>>, %arg4: memref<1x8xf32, #tpu.memory_space<vmem>>) attributes {dimension_semantics = [#tpu.dimension_semantics<parallel>], iteration_bounds = array<i64: 1>, scalar_prefetch = 0 : i64, scratch_operands = 0 : i64, tpu.core_type = #tpu.core_type<tc>, window_params = [{transform_indices = @transform_0, window_bounds = array<i64: 8, 16>}, {transform_indices = @transform_1, window_bounds = array<i64: 8, 1>}, {transform_indices = @transform_2, window_bounds = array<i64: 8, 1>}, {transform_indices = @transform_3, window_bounds = array<i64: 1, 8>}]} {
    %c0 = arith.constant 0 : index
    %c0_0 = arith.constant 0 : index
    %0 = vector.load %arg1[%c0, %c0_0] : memref<8x16xf32, #tpu.memory_space<vmem>>, vector<8x16xf32>
    %c0_1 = arith.constant 0 : index
    %c0_2 = arith.constant 0 : index
    %1 = vector.load %arg2[%c0_1, %c0_2] : memref<8x1xi32, #tpu.memory_space<vmem>>, vector<8x1xi32>
    %cst = arith.constant dense<0xFF800000> : vector<8xf32>
    %2 = vector.multi_reduction <maximumf>, %0, %cst [1] : vector<8x16xf32> to vector<8xf32>
    %3 = vector.shape_cast %2 : vector<8xf32> to vector<8x1xf32>
    %4 = vector.broadcast %3 : vector<8x1xf32> to vector<8x16xf32>
    %5 = arith.subf %0, %4 : vector<8x16xf32>
    %6 = math.exp %5 : vector<8x16xf32>
    %cst_3 = arith.constant dense<0.000000e+00> : vector<8xf32>
    %7 = vector.multi_reduction <add>, %6, %cst_3 [1] : vector<8x16xf32> to vector<8xf32>
    %8 = vector.shape_cast %7 : vector<8xf32> to vector<8x1xf32>
    %9 = math.log %8 : vector<8x1xf32>
    %10 = tpu.iota {dimensions = array<i32: 1>} : vector<8x16xi32>
    %11 = vector.broadcast %1 : vector<8x1xi32> to vector<8x16xi32>
    %12 = arith.cmpi eq, %10, %11 : vector<8x16xi32>
    %cst_4 = arith.constant 0.000000e+00 : f32
    %13 = vector.broadcast %cst_4 : f32 to vector<8x16xf32>
    %14 = arith.select %12, %5, %13 : vector<8x16xi1>, vector<8x16xf32>
    %cst_5 = arith.constant dense<0.000000e+00> : vector<8xf32>
    %15 = vector.multi_reduction <add>, %14, %cst_5 [1] : vector<8x16xf32> to vector<8xf32>
    %16 = vector.shape_cast %15 : vector<8xf32> to vector<8x1xf32>
    %cst_6 = arith.constant dense<0.000000e+00> : vector<8xf32>
    %17 = vector.multi_reduction <add>, %5, %cst_6 [1] : vector<8x16xf32> to vector<8xf32>
    %18 = vector.shape_cast %17 : vector<8xf32> to vector<8x1xf32>
    %19 = arith.subf %9, %16 : vector<8x1xf32>
    %cst_7 = arith.constant 6.250000e-02 : f32
    %20 = vector.broadcast %cst_7 : f32 to vector<8x1xf32>
    %21 = arith.mulf %18, %20 : vector<8x1xf32>
    %22 = arith.subf %9, %21 : vector<8x1xf32>
    %cst_8 = arith.constant 0.899999976 : f32
    %23 = vector.broadcast %cst_8 : f32 to vector<8x1xf32>
    %24 = arith.mulf %23, %19 : vector<8x1xf32>
    %cst_9 = arith.constant 1.000000e-01 : f32
    %25 = vector.broadcast %cst_9 : f32 to vector<8x1xf32>
    %26 = arith.mulf %25, %22 : vector<8x1xf32>
    %27 = arith.addf %24, %26 : vector<8x1xf32>
    %c0_10 = arith.constant 0 : index
    %c0_11 = arith.constant 0 : index
    %28 = vector.load %arg3[%c0_10, %c0_11] : memref<8x1xf32, #tpu.memory_space<vmem>>, vector<8x1xf32>
    %29 = arith.mulf %27, %28 : vector<8x1xf32>
    %30 = tpu.transpose %29, [1, 0] : vector<8x1xf32> -> vector<1x8xf32>
    %c0_12 = arith.constant 0 : index
    %c0_13 = arith.constant 0 : index
    %31 = vector.load %arg4[%c0_12, %c0_13] : memref<1x8xf32, #tpu.memory_space<vmem>>, vector<1x8xf32>
    tpu.vector_store %arg4[%c0_12, %c0_13], %30 {strides = array<i32>} : memref<1x8xf32, #tpu.memory_space<vmem>>, vector<1x8xf32>,
    return
  }
  func.func @transform_0(%arg0: i32) -> (i32, i32) {
    %c0_i32 = arith.constant 0 : i32
    %c0_i32_0 = arith.constant 0 : i32
    return %arg0, %c0_i32 : i32, i32
  }
  func.func @transform_1(%arg0: i32) -> (i32, i32) {
    %c0_i32 = arith.constant 0 : i32
    %c0_i32_0 = arith.constant 0 : i32
    return %arg0, %c0_i32 : i32, i32
  }
  func.func @transform_2(%arg0: i32) -> (i32, i32) {
    %c0_i32 = arith.constant 0 : i32
    %c0_i32_0 = arith.constant 0 : i32
    return %arg0, %c0_i32 : i32, i32
  }
  func.func @transform_3(%arg0: i32) -> (i32, i32) {
    %c0_i32 = arith.constant 0 : i32
    %c0_i32_0 = arith.constant 0 : i32
    return %c0_i32, %arg0 : i32, i32
  }
}

</mosaic_0001>

<llo_original>
// kernel: tpu_custom_call.1
$region0: #{tpu_custom_call.1}
  #allocation0 [shape = 'u32[]', space=smem, size = 0x4, offset = 0x4, fixed_abs, tag = 'smem constant byte address 0x4 - core index']
  #allocation1 [shape = 'u32[72,128]{1,0:T(1,128)}', space=vmem, size = 0x9000, scoped, tag = 'internal scratch']
  %s0 = inlined_call_operand.vmem [shape: f32[8,16], index: 0, kind: input, shape index: {}]
  %s1 = inlined_call_operand.vmem [shape: s32[8,1], index: 1, kind: input, shape index: {}]
  %s2 = inlined_call_operand.vmem [shape: f32[8,1], index: 2, kind: input, shape index: {}]
  %s3 = inlined_call_operand.hbm [shape: f32[1,8], index: 3, kind: output, shape index: {}]
  %s4 = sld [smem:[#allocation0]]
  $region22: #{tpu_custom_call.1} parent=0
    _
  %s6 = ssub.s32 1, %s4
  %s7 = scalar_select 0, %s6, %s4
  $region1: #{tpu_custom_call.1} parent=0
    #allocation2 [shape = 'u8[512]{0}', space=vmem, size = 0x400, scoped, tag = 'output window, operand 0, single buffered']
    #allocation3 [shape = 's32[1]{0}', space=sflag, size = 0x4, scoped, tag = 'scoped memory for tpu_custom_call.1']
    %8 = vsyncpa [#allocation3], 0
    // Predicated region
    $region2: #{tpu_custom_call.1} parent=1 // pred_check
      _
    $region3: #{tpu_custom_call.1} parent=1 // pred_check_branch
      %10 = sbr.rel (0) target = $region5
    $region4: #{tpu_custom_call.1} parent=1 // pred_region
      _
    $region5: #{tpu_custom_call.1} parent=1 // pred_fallthru
      _
    // Predicated region
    $region6: #{tpu_custom_call.1} parent=1 // pred_check
      _
    $region7: #{tpu_custom_call.1} parent=1 // pred_check_branch
      %12 = sbr.rel (0) target = $region9
    $region8: #{tpu_custom_call.1} parent=1 // pred_region
      _
    $region9: #{tpu_custom_call.1} parent=1 // pred_fallthru
      _
    // Predicated region
    $region10: #{tpu_custom_call.1} parent=1 // pred_check
      _
    $region11: #{tpu_custom_call.1} parent=1 // pred_check_branch
      %14 = sbr.rel (0) target = $region13
    $region12: #{tpu_custom_call.1} parent=1 // pred_region
      _
    $region13: #{tpu_custom_call.1} parent=1 // pred_fallthru
      _
    %v15 = vld [vmem:[%s0] sm:$0xff]
    %v16 = vld [vmem:[%s1] sm:$0xff]
    %vm17 = vcmask 130048
    %v18 = vsel %vm17, %v15, -inf
    %19 = vmax.xlane.f32.xlu0 %v18
    %v20 = vpop.xlane.xlu0 %19
    %v21 = vsub.f32 %v15, %v20
    %v22 = vmul.f32 %v21, 1.442695
    %v23 = vpow.pop %v22
    %v24 = vsel %vm17, %v23, 0.0
    %25 = vadd.xlane.f32.xlu0 %v24
    %v26 = vpop.xlane.xlu0 %25
    %v27 = vlog2.pop %v26
    %v28 = vmul.f32 %v27, 0.6931472
    %v29 = vlaneseq
    %v30 = vand.u32 %v29, 127
    %31 = vset.pattern.permute.xlu0 0
    %32 = vperm.xlu0 %31, %v16
    %v33 = vpop.permute.xlu0 %32
    %vm34 = vcmp.eq.s32.totalorder %v30, %v33
    %v35 = vsel %vm34, %v21, 0.0
    %v36 = vsel %vm17, %v35, 0.0
    %37 = vadd.xlane.f32.xlu0 %v36
    %v38 = vpop.xlane.xlu0 %37
    %v39 = vsel %vm17, %v21, 0.0
    %40 = vadd.xlane.f32.xlu0 %v39
    %v41 = vpop.xlane.xlu0 %40
    %v42 = vsub.f32 %v28, %v38
    %v43 = vmul.f32 %v41, 0.0625
    %v44 = vsub.f32 %v28, %v43
    %v45 = vmul.f32 %v42, 0.9
    %v46 = vmul.f32 %v44, 0.1
    %v47 = vadd.f32 %v45, %v46
    %v48 = vld [vmem:[%s2] sm:$0xff]
    %v49 = vmul.f32 %v47, %v48
    %50 = vxpose.xlu0.b32.start [1/16] %v49, 128
    %51 = vxpose.xlu0.b32.cont [2/16] 0.0, 128
    %52 = vxpose.xlu0.b32.cont [3/16] 0.0, 128
    %53 = vxpose.xlu0.b32.cont [4/16] 0.0, 128
    %54 = vxpose.xlu0.b32.cont [5/16] 0.0, 128
    %55 = vxpose.xlu0.b32.cont [6/16] 0.0, 128
    %56 = vxpose.xlu0.b32.cont [7/16] 0.0, 128
    %57 = vxpose.xlu0.b32.cont [8/16] 0.0, 128
    %58 = vxpose.xlu0.b32.cont [9/16] 0.0, 128
    %59 = vxpose.xlu0.b32.cont [10/16] 0.0, 128
    %60 = vxpose.xlu0.b32.cont [11/16] 0.0, 128
    %61 = vxpose.xlu0.b32.cont [12/16] 0.0, 128
    %62 = vxpose.xlu0.b32.cont [13/16] 0.0, 128
    %63 = vxpose.xlu0.b32.cont [14/16] 0.0, 128
    %64 = vxpose.xlu0.b32.cont [15/16] 0.0, 128
    %65 = vxpose.xlu0.b32.end [16/16] 0.0, 128
    %v66 = vpop.trf.xlu0
    %v67 = vpop.trf.xlu0
    %v68 = vpop.trf.xlu0
    %v69 = vpop.trf.xlu0
    %v70 = vpop.trf.xlu0
    %v71 = vpop.trf.xlu0
    %v72 = vpop.trf.xlu0
    %v73 = vpop.trf.xlu0
    %v74 = vpop.trf.xlu0
    %v75 = vpop.trf.xlu0
    %v76 = vpop.trf.xlu0
    %v77 = vpop.trf.xlu0
    %v78 = vpop.trf.xlu0
    %v79 = vpop.trf.xlu0
    %v80 = vpop.trf.xlu0
    %v81 = vpop.trf.xlu0
    %vm82 = vcmask 57344
    %83 = vst.msk [vmem:[#allocation2] sm:$0x1] %vm82, %v66
    // Predicated region
    $region14: #{tpu_custom_call.1} parent=1 // pred_check
      _
    $region15: #{tpu_custom_call.1} parent=1 // pred_check_branch
      %85 = sbr.rel (0) target = $region17
    $region16: #{tpu_custom_call.1} parent=1 // pred_region
      %87 = vsyncadd [#allocation3], 0
      %s89 = sshll.u32 [#allocation2], 4
      %s90 = int_to_ptr.vmem [resolvable:$true] %s89
      %s91 = sshll.u32 %s3, 4
      %s92 = int_to_ptr.hbm [resolvable:$true] %s91
      %94 = dma.vmem_to_hbm [thread:$0]  %s90, 16, %s92, [#allocation3]
    $region17: #{tpu_custom_call.1} parent=1 // pred_fallthru
      _
    // Predicated region
    $region18: #{tpu_custom_call.1} parent=1 // pred_check
      _
    $region19: #{tpu_custom_call.1} parent=1 // pred_check_branch
      %96 = sbr.rel (0) target = $region21
    $region20: #{tpu_custom_call.1} parent=1 // pred_region
      %98 = dma.done [#allocation3], 16
    $region21: #{tpu_custom_call.1} parent=1 // pred_fallthru
      _
    %99 = vsyncpa [#allocation3], 1

</llo_original>
